<compile_context>
chip_gen: v7x
topology: tpu7x:2x2x1
jax: 0.10.0
libtpu: 0.0.40
codegen_flags: <defaults>
</compile_context>

<pallas_src>
import math
import functools

import jax
import jax.numpy as jnp
from jax import lax
from jax.experimental import pallas as pl
from jax.experimental.pallas import tpu as pltpu

_SQRT_2_OVER_PI = math.sqrt(2.0 / math.pi)
_VMEM_LIMIT = 48 * 1024 * 1024   # explicit scoped-VMEM limit with headroom for v7x (64 MiB)


def _full_spec(a):
    """Whole-array BlockSpec (block index constant -> fetched once, stays resident)."""
    nd = a.ndim
    return pl.BlockSpec(a.shape, lambda *_, nd=nd: (0,) * nd)


# --------------------- kernel 1: LayerNorm1 + fused QKV projection ---------------------
def _ln_qkv_kernel(x_ref, g_ref, b_ref, w_ref, bias_ref, o_ref):
    x = x_ref[0].astype(jnp.float32)                              # (TQ, C)
    mu = jnp.mean(x, axis=-1, keepdims=True)
    var = jnp.mean(jnp.square(x - mu), axis=-1, keepdims=True)
    h = (x - mu) * lax.rsqrt(var + 1e-5) * g_ref[...] + b_ref[...]
    qkv = jnp.dot(h.astype(jnp.bfloat16), w_ref[...],             # bf16 x bf16 -> f32 acc
                  preferred_element_type=jnp.float32) + bias_ref[...]
    o_ref[0] = qkv.astype(o_ref.dtype)                            # lane-dense (TQ, 3C) store


# --------------------- kernel 2: causal flash attention (online softmax) ---------------
def _flash_attn_kernel(q_ref, k_ref, v_ref, o_ref, m_sc, l_sc, acc_sc, *, tq, tk):
    qi = pl.program_id(1)
    kv = pl.program_id(2)

    @pl.when(kv == 0)
    def _():
        m_sc[...] = jnp.full_like(m_sc, -jnp.inf)
        l_sc[...] = jnp.zeros_like(l_sc)
        acc_sc[...] = jnp.zeros_like(acc_sc)

    @pl.when(kv <= qi)                       # causal: skip fully-masked KV blocks
    def _():
        q = q_ref[0]                         # (NH, TQ, HD) bf16 (1/sqrt(HD) pre-folded)
        k = k_ref[0]                         # (NH, TK, HD) bf16
        v = v_ref[0]                         # (NH, TK, HD) bf16
        s = jnp.einsum("hqd,hkd->hqk", q, k,
                       preferred_element_type=jnp.float32)        # (NH, TQ, TK) f32
        # causal mask from block indices (only non-trivial on the diagonal block)
        row = qi * tq + lax.broadcasted_iota(jnp.int32, (tq, tk), 0)
        col = kv * tk + lax.broadcasted_iota(jnp.int32, (tq, tk), 1)
        s = jnp.where((row >= col)[None, :, :], s, -jnp.inf)
        m_new = jnp.maximum(m_sc[...], jnp.max(s, axis=-1, keepdims=True))
        alpha = jnp.exp(m_sc[...] - m_new)
        p = jnp.exp(s - m_new)
        l_sc[...] = alpha * l_sc[...] + jnp.sum(p, axis=-1, keepdims=True)
        acc_sc[...] = alpha * acc_sc[...] + jnp.einsum(
            "hqk,hkd->hqd", p.astype(v.dtype), v,
            preferred_element_type=jnp.float32)
        m_sc[...] = m_new

    @pl.when(kv == pl.num_programs(2) - 1)
    def _():
        o_ref[0] = (acc_sc[...] * pl.reciprocal(l_sc[...], approx=True)
                    ).astype(o_ref.dtype)


# ------------ kernel 3: attn out-proj + residual, LayerNorm2 + MLP + residual ----------
def _proj_mlp_kernel(x_ref, y_ref, wap_ref, bap_ref, g2_ref, b2_ref,
                     wfc_ref, bfc_ref, wmp_ref, bmp_ref, o_ref):
    x = x_ref[0].astype(jnp.float32)                              # (TQ, C) residual stream
    y = y_ref[0]                                                  # (TQ, C) bf16 attention out
    x1 = x + jnp.dot(y, wap_ref[...],
                     preferred_element_type=jnp.float32) + bap_ref[...]
    mu = jnp.mean(x1, axis=-1, keepdims=True)
    var = jnp.mean(jnp.square(x1 - mu), axis=-1, keepdims=True)
    h2 = (x1 - mu) * lax.rsqrt(var + 1e-5) * g2_ref[...] + b2_ref[...]
    f = jnp.dot(h2.astype(jnp.bfloat16), wfc_ref[...],
                preferred_element_type=jnp.float32) + bfc_ref[...]          # (TQ, 4C)
    g = 0.5 * f * (1.0 + jnp.tanh(_SQRT_2_OVER_PI * (f + 0.044715 * f * f * f)))
    m = jnp.dot(g.astype(jnp.bfloat16), wmp_ref[...],
                preferred_element_type=jnp.float32) + bmp_ref[...]          # (TQ, C)
    o_ref[0] = (x1 + m).astype(o_ref.dtype)                       # lane-dense (TQ, C) store


# ----------------------------------- wrapper -------------------------------------------
def gpt_block(x, params, n_head, *, block_t=128):
    B, T, C = x.shape
    NH = n_head
    assert C % NH == 0
    HD = C // NH
    TQ = min(T, block_t)
    assert T % TQ == 0, "T must be divisible by the sequence tile"
    nT = T // TQ
    bf16 = jnp.bfloat16

    # Fold the 1/sqrt(HD) softmax scale into the q columns of the QKV projection
    # (pure weight preprocessing) and cast matmul weights to bf16 once.
    scale = 1.0 / math.sqrt(HD)
    qcol = jnp.concatenate([jnp.full((C,), scale, jnp.float32),
                            jnp.ones((2 * C,), jnp.float32)])
    w_qkv = (params["w_qkv"] * qcol).astype(bf16)
    b_qkv = params["b_qkv"] * qcol
    w_ap = params["w_ap"].astype(bf16)
    w_fc = params["w_fc"].astype(bf16)
    w_mp = params["w_mp"].astype(bf16)
    # TODO(synk): on v7x, add pipeline_mode=pl.Buffered(1) to the resident weight specs
    # to drop their double-buffer copy (bf16 weights already halve the footprint).

    par2 = pltpu.CompilerParams(dimension_semantics=("parallel", "parallel"),
                                vmem_limit_bytes=_VMEM_LIMIT)
    par3 = pltpu.CompilerParams(
        dimension_semantics=("parallel", "parallel", "arbitrary"),
        vmem_limit_bytes=_VMEM_LIMIT)

    # ---- 1) LN1 + fused QKV projection, tiled over (B, T-blocks) ----
    qkv = pl.pallas_call(
        _ln_qkv_kernel,
        out_shape=jax.ShapeDtypeStruct((B, T, 3 * C), bf16),
        grid_spec=pltpu.PrefetchScalarGridSpec(
            num_scalar_prefetch=0,
            grid=(B, nT),
            in_specs=[pl.BlockSpec((1, TQ, C), lambda b, i: (b, i, 0)),
                      _full_spec(params["ln1_g"]), _full_spec(params["ln1_b"]),
                      _full_spec(w_qkv), _full_spec(b_qkv)],
            out_specs=pl.BlockSpec((1, TQ, 3 * C), lambda b, i: (b, i, 0))),
        compiler_params=par2,
    )(x, params["ln1_g"], params["ln1_b"], w_qkv, b_qkv)

    # Wrapper-side head split: pure layout plumbing (fuses into one XLA transpose pass).
    q, k, v = jnp.split(qkv, 3, axis=-1)
    heads = lambda t: t.reshape(B, T, NH, HD).transpose(0, 2, 1, 3)   # (B, NH, T, HD)
    q, k, v = heads(q), heads(k), heads(v)

    # ---- 2) causal flash attention over KV blocks, heads batched on the MXU ----
    y = pl.pallas_call(
        functools.partial(_flash_attn_kernel, tq=TQ, tk=TQ),
        out_shape=jax.ShapeDtypeStruct((B, NH, T, HD), bf16),
        grid_spec=pltpu.PrefetchScalarGridSpec(
            num_scalar_prefetch=0,
            grid=(B, nT, nT),
            in_specs=[
                pl.BlockSpec((1, NH, TQ, HD), lambda b, i, j: (b, 0, i, 0)),
                # clamp kv block index for causally-skipped steps -> no wasted DMA
                pl.BlockSpec((1, NH, TQ, HD),
                             lambda b, i, j: (b, 0, jnp.minimum(j, i), 0)),
                pl.BlockSpec((1, NH, TQ, HD),
                             lambda b, i, j: (b, 0, jnp.minimum(j, i), 0)),
            ],
            out_specs=pl.BlockSpec((1, NH, TQ, HD), lambda b, i, j: (b, 0, i, 0)),
            scratch_shapes=[pltpu.VMEM((NH, TQ, 1), jnp.float32),     # running max
                            pltpu.VMEM((NH, TQ, 1), jnp.float32),     # running denom
                            pltpu.VMEM((NH, TQ, HD), jnp.float32)]),  # output accumulator
        compiler_params=par3,
    )(q, k, v)

    y = y.transpose(0, 2, 1, 3).reshape(B, T, C)   # back to (B, T, C), bf16

    # ---- 3) attn out-proj + residual, LN2 + MLP + residual, tiled over (B, T-blocks) ----
    out = pl.pallas_call(
        _proj_mlp_kernel,
        out_shape=jax.ShapeDtypeStruct((B, T, C), x.dtype),
        grid_spec=pltpu.PrefetchScalarGridSpec(
            num_scalar_prefetch=0,
            grid=(B, nT),
            in_specs=[pl.BlockSpec((1, TQ, C), lambda b, i: (b, i, 0)),
                      pl.BlockSpec((1, TQ, C), lambda b, i: (b, i, 0)),
                      _full_spec(w_ap), _full_spec(params["b_ap"]),
                      _full_spec(params["ln2_g"]), _full_spec(params["ln2_b"]),
                      _full_spec(w_fc), _full_spec(params["b_fc"]),
                      _full_spec(w_mp), _full_spec(params["b_mp"])],
            out_specs=pl.BlockSpec((1, TQ, C), lambda b, i: (b, i, 0))),
        compiler_params=par2,
    )(x, y, w_ap, params["b_ap"], params["ln2_g"], params["ln2_b"],
      w_fc, params["b_fc"], w_mp, params["b_mp"])
    return out


# --------------------------- pure-JAX reference (f32) ----------------------------------
def _reference_block(x, p, n_head):
    B, T, C = x.shape
    HD = C // n_head

    def ln(z, g, b):
        mu = jnp.mean(z, axis=-1, keepdims=True)
        var = jnp.mean((z - mu) ** 2, axis=-1, keepdims=True)
        return (z - mu) / jnp.sqrt(var + 1e-5) * g[0] + b[0]

    h = ln(x, p["ln1_g"], p["ln1_b"])
    qkv = h @ p["w_qkv"] + p["b_qkv"][0]
    q, k, v = jnp.split(qkv, 3, axis=-1)
    q = q.reshape(B, T, n_head, HD).transpose(0, 2, 1, 3)
    k = k.reshape(B, T, n_head, HD).transpose(0, 2, 1, 3)
    v = v.reshape(B, T, n_head, HD).transpose(0, 2, 1, 3)
    att = (q @ k.transpose(0, 1, 3, 2)) / math.sqrt(HD)
    mask = jnp.tril(jnp.ones((T, T), bool))
    att = jnp.where(mask, att, -jnp.inf)
    att = jax.nn.softmax(att, axis=-1)
    y = (att @ v).transpose(0, 2, 1, 3).reshape(B, T, C)
    x = x + (y @ p["w_ap"] + p["b_ap"][0])

    h2 = ln(x, p["ln2_g"], p["ln2_b"])
    f = h2 @ p["w_fc"] + p["b_fc"][0]
    g = 0.5 * f * (1.0 + jnp.tanh(math.sqrt(2.0 / math.pi) * (f + 0.044715 * f ** 3)))
    return x + (g @ p["w_mp"] + p["b_mp"][0])


def _init_params(key, C):
    ks = jax.random.split(key, 10)
    n = lambda k, shape, s=0.02: (s * jax.random.normal(k, shape)).astype(jnp.float32)
    return {
        "ln1_g": jnp.ones((1, C), jnp.float32) + n(ks[0], (1, C)),
        "ln1_b": n(ks[1], (1, C)),
        "w_qkv": n(ks[2], (C, 3 * C)),       # c_attn weight, (in, out)
        "b_qkv": n(ks[3], (1, 3 * C)),
        "w_ap":  n(ks[4], (C, C)),           # attention c_proj
        "b_ap":  n(ks[5], (1, C)),
        "ln2_g": jnp.ones((1, C), jnp.float32) + n(ks[6], (1, C)),
        "ln2_b": n(ks[7], (1, C)),
        "w_fc":  n(ks[8], (C, 4 * C)),       # mlp c_fc
        "b_fc":  n(ks[9], (1, 4 * C)),
        "w_mp":  n(ks[0], (4 * C, C)),       # mlp c_proj
        "b_mp":  n(ks[1], (1, C)),
    }


if __name__ == "__main__":
    B, T, C, NH = 2, 32, 128, 4
    key = jax.random.PRNGKey(0)
    kx, kp = jax.random.split(key)
    x = jax.random.normal(kx, (B, T, C), dtype=jnp.float32)
    params = _init_params(kp, C)

    # block_t=16 -> 2 q-blocks x 2 kv-blocks: exercises the flash loop + causal skipping.
    out = gpt_block(x, params, NH, block_t=16)
    out = jax.block_until_ready(out)

    ref = _reference_block(x, params, NH)
    assert out.shape == (B, T, C)
    # bf16 MXU operands -> compare against the f32 reference with a bf16-level tolerance.
    assert jnp.allclose(out, ref, atol=2e-2, rtol=2e-2), "mismatch vs pure-JAX reference"
    print("KERNEL_OK")
</pallas_src>

<mosaic_0001>
module attributes {stable_mosaic.version = 11 : i64} {
  func.func @_ln_qkv_kernel(%arg0: i32, %arg1: i32, %arg2: memref<1x16x128xf32, #tpu.memory_space<vmem>>, %arg3: memref<1x128xf32, #tpu.memory_space<vmem>>, %arg4: memref<1x128xf32, #tpu.memory_space<vmem>>, %arg5: memref<128x384xbf16, #tpu.memory_space<vmem>>, %arg6: memref<1x384xf32, #tpu.memory_space<vmem>>, %arg7: memref<1x16x384xbf16, #tpu.memory_space<vmem>>) attributes {dimension_semantics = [#tpu.dimension_semantics<parallel>, #tpu.dimension_semantics<parallel>], iteration_bounds = array<i64: 2, 2>, scalar_prefetch = 0 : i64, scratch_operands = 0 : i64, tpu.core_type = #tpu.core_type<tc>, window_params = [{transform_indices = @transform_0, window_bounds = array<i64: 1, 16, 128>}, {pipeline_mode = #tpu.pipeline_mode<synchronous>, transform_indices = @transform_1, window_bounds = array<i64: 1, 128>}, {pipeline_mode = #tpu.pipeline_mode<synchronous>, transform_indices = @transform_2, window_bounds = array<i64: 1, 128>}, {pipeline_mode = #tpu.pipeline_mode<synchronous>, transform_indices = @transform_3, window_bounds = array<i64: 128, 384>}, {pipeline_mode = #tpu.pipeline_mode<synchronous>, transform_indices = @transform_4, window_bounds = array<i64: 1, 384>}, {transform_indices = @transform_5, window_bounds = array<i64: 1, 16, 384>}]} {
    %c0 = arith.constant 0 : index
    %c0_0 = arith.constant 0 : index
    %c0_1 = arith.constant 0 : index
    %0 = vector.load %arg2[%c0, %c0_0, %c0_1] : memref<1x16x128xf32, #tpu.memory_space<vmem>>, vector<1x16x128xf32>
    %1 = vector.shape_cast %0 : vector<1x16x128xf32> to vector<16x128xf32>
    %cst = arith.constant dense<0.000000e+00> : vector<16xf32>
    %2 = vector.multi_reduction <add>, %1, %cst [1] : vector<16x128xf32> to vector<16xf32>
    %3 = vector.shape_cast %2 : vector<16xf32> to vector<16x1xf32>
    %cst_2 = arith.constant 1.280000e+02 : f32
    %4 = vector.broadcast %cst_2 : f32 to vector<16x1xf32>
    %5 = arith.divf %3, %4 : vector<16x1xf32>
    %6 = vector.broadcast %5 : vector<16x1xf32> to vector<16x128xf32>
    %7 = arith.subf %1, %6 : vector<16x128xf32>
    %8 = arith.mulf %7, %7 : vector<16x128xf32>
    %cst_3 = arith.constant dense<0.000000e+00> : vector<16xf32>
    %9 = vector.multi_reduction <add>, %8, %cst_3 [1] : vector<16x128xf32> to vector<16xf32>
    %10 = vector.shape_cast %9 : vector<16xf32> to vector<16x1xf32>
    %cst_4 = arith.constant 1.280000e+02 : f32
    %11 = vector.broadcast %cst_4 : f32 to vector<16x1xf32>
    %12 = arith.divf %10, %11 : vector<16x1xf32>
    %13 = vector.broadcast %5 : vector<16x1xf32> to vector<16x128xf32>
    %14 = arith.subf %1, %13 : vector<16x128xf32>
    %cst_5 = arith.constant 9.99999974E-6 : f32
    %15 = vector.broadcast %cst_5 : f32 to vector<16x1xf32>
    %16 = arith.addf %12, %15 : vector<16x1xf32>
    %17 = math.rsqrt %16 : vector<16x1xf32>
    %18 = vector.broadcast %17 : vector<16x1xf32> to vector<16x128xf32>
    %19 = arith.mulf %14, %18 : vector<16x128xf32>
    %c0_6 = arith.constant 0 : index
    %c0_7 = arith.constant 0 : index
    %20 = vector.load %arg3[%c0_6, %c0_7] : memref<1x128xf32, #tpu.memory_space<vmem>>, vector<1x128xf32>
    %21 = vector.broadcast %20 : vector<1x128xf32> to vector<16x128xf32>
    %22 = arith.mulf %19, %21 : vector<16x128xf32>
    %c0_8 = arith.constant 0 : index
    %c0_9 = arith.constant 0 : index
    %23 = vector.load %arg4[%c0_8, %c0_9] : memref<1x128xf32, #tpu.memory_space<vmem>>, vector<1x128xf32>
    %24 = vector.broadcast %23 : vector<1x128xf32> to vector<16x128xf32>
    %25 = arith.addf %22, %24 : vector<16x128xf32>
    %26 = arith.truncf %25 : vector<16x128xf32> to vector<16x128xbf16>
    %c0_10 = arith.constant 0 : index
    %c0_11 = arith.constant 0 : index
    %27 = vector.load %arg5[%c0_10, %c0_11] : memref<128x384xbf16, #tpu.memory_space<vmem>>, vector<128x384xbf16>
    %cst_12 = arith.constant dense<0.000000e+00> : vector<16x384xf32>
    %28 = tpu.matmul %26, %27, %cst_12 {dimension_numbers = #tpu.dot_dimension_numbers<[1], [0], [0], [1], [0, 0, 1, 1], [], []>} : vector<16x128xbf16>, vector<128x384xbf16>, vector<16x384xf32> -> vector<16x384xf32>
    %c0_13 = arith.constant 0 : index
    %c0_14 = arith.constant 0 : index
    %29 = vector.load %arg6[%c0_13, %c0_14] : memref<1x384xf32, #tpu.memory_space<vmem>>, vector<1x384xf32>
    %30 = vector.broadcast %29 : vector<1x384xf32> to vector<16x384xf32>
    %31 = arith.addf %28, %30 : vector<16x384xf32>
    %32 = arith.truncf %31 : vector<16x384xf32> to vector<16x384xbf16>
    %c0_15 = arith.constant 0 : index
    %c0_16 = arith.constant 0 : index
    %c0_17 = arith.constant 0 : index
    %33 = vector.load %arg7[%c0_15, %c0_16, %c0_17] : memref<1x16x384xbf16, #tpu.memory_space<vmem>>, vector<1x16x384xbf16>
    %34 = vector.shape_cast %33 : vector<1x16x384xbf16> to vector<16x384xbf16>
    %35 = vector.shape_cast %32 : vector<16x384xbf16> to vector<1x16x384xbf16>
    tpu.vector_store %arg7[%c0_15, %c0_16, %c0_17], %35 {strides = array<i32>} : memref<1x16x384xbf16, #tpu.memory_space<vmem>>, vector<1x16x384xbf16>,
    return
  }
  func.func @transform_0(%arg0: i32, %arg1: i32) -> (i32, i32, i32) {
    %c0_i32 = arith.constant 0 : i32
    %c0_i32_0 = arith.constant 0 : i32
    return %arg0, %arg1, %c0_i32 : i32, i32, i32
  }
  func.func @transform_1(%arg0: i32, %arg1: i32) -> (i32, i32) {
    %c0_i32 = arith.constant 0 : i32
    %c0_i32_0 = arith.constant 0 : i32
    %c0_i32_1 = arith.constant 0 : i32
    return %c0_i32, %c0_i32_0 : i32, i32
  }
  func.func @transform_2(%arg0: i32, %arg1: i32) -> (i32, i32) {
    %c0_i32 = arith.constant 0 : i32
    %c0_i32_0 = arith.constant 0 : i32
    %c0_i32_1 = arith.constant 0 : i32
    return %c0_i32, %c0_i32_0 : i32, i32
  }
  func.func @transform_3(%arg0: i32, %arg1: i32) -> (i32, i32) {
    %c0_i32 = arith.constant 0 : i32
    %c0_i32_0 = arith.constant 0 : i32
    %c0_i32_1 = arith.constant 0 : i32
    return %c0_i32, %c0_i32_0 : i32, i32
  }
  func.func @transform_4(%arg0: i32, %arg1: i32) -> (i32, i32) {
    %c0_i32 = arith.constant 0 : i32
    %c0_i32_0 = arith.constant 0 : i32
    %c0_i32_1 = arith.constant 0 : i32
    return %c0_i32, %c0_i32_0 : i32, i32
  }
  func.func @transform_5(%arg0: i32, %arg1: i32) -> (i32, i32, i32) {
    %c0_i32 = arith.constant 0 : i32
    %c0_i32_0 = arith.constant 0 : i32
    return %arg0, %arg1, %c0_i32 : i32, i32, i32
  }
}

</mosaic_0001>

<llo_original>
// kernel: tpu_custom_call.1
$region0: #{tpu_custom_call.1}
  #allocation0 [shape = 'u32[]', space=smem, size = 0x4, offset = 0x4, fixed_abs, tag = 'smem constant byte address 0x4 - core index']
  #allocation1 [shape = 'u32[144,128]{1,0:T(1,128)}', space=vmem, size = 0x12000, scoped, tag = 'internal scratch']
  %s0 = inlined_call_operand.hbm [shape: f32[2,32,128], index: 0, kind: input, shape index: {}]
  %s1 = inlined_call_operand.vmem [shape: f32[1,128], index: 1, kind: input, shape index: {}]
  %s2 = inlined_call_operand.vmem [shape: f32[1,128], index: 2, kind: input, shape index: {}]
  %s3 = inlined_call_operand.hbm [shape: bf16[128,384], index: 3, kind: input, shape index: {}]
  %s4 = inlined_call_operand.vmem [shape: f32[1,384], index: 4, kind: input, shape index: {}]
  %s5 = inlined_call_operand.hbm [shape: bf16[2,32,384], index: 5, kind: output, shape index: {}]
  %s6 = sld [smem:[#allocation0]]
  $region61: #{tpu_custom_call.1} parent=0
    _
  %s8 = ssub.s32 1, %s6
  %s9 = scalar_select 0, %s8, %s6
  $region1: #{tpu_custom_call.1} parent=0
    #allocation2 [shape = 'u8[16384]{0}', space=vmem, size = 0x4000, scoped, tag = 'input window, operand 0']
    #allocation3 [shape = 's32[2]{0}', space=sflag, size = 0x8, scoped, tag = 'scoped memory for tpu_custom_call.1']
    #allocation4 [shape = 's32[2]{0}', space=sflag, size = 0x8, scoped, tag = 'scoped memory for tpu_custom_call.1']
    #allocation5 [shape = 'u8[98304]{0}', space=vmem, size = 0x18000, scoped, tag = 'input window, operand 3, single buffered']
    #allocation6 [shape = 's32[1]{0}', space=sflag, size = 0x4, scoped, tag = 'scoped memory for tpu_custom_call.1']
    #allocation7 [shape = 'u8[24576]{0}', space=vmem, size = 0x6000, scoped, tag = 'output window, operand 0']
    %10 = vsyncpa [#allocation3], 0
    %s11 = scalar_lea.sflag [#allocation3], 1
    %12 = vsyncpa %s11, 0
    %13 = vsyncpa [#allocation6], 0
    %14 = vsyncpa [#allocation4], 0
    %s15 = scalar_lea.sflag [#allocation4], 1
    %16 = vsyncpa %s15, 0
    loop: start=0, step=1, limit=6
    $region2: #{tpu_custom_call.1} parent=1 // loop_pre_header
      _
    $region3: #{tpu_custom_call.1} parent=1 // loop_header
      %s18 = sphi 0, %s22
      %p19 = scmp.ge.s32.totalorder %s18, 6
      %s25 = sphi 0, %s37
      %s26 = sphi 0, %s33
      %s27 = sphi 0, %s25
      %s28 = sphi 0, %s26
      %s29 = sphi 0, %s27
      %s30 = sphi 0, %s28
      %s42 = sphi 0, %s44
      %s45 = sphi 0, %s42
      %s46 = sphi 0, %s45
      %s62 = sphi 0, %s46
      %s66 = sphi 0, %s66
      %s68 = sphi 0, %s66
      %s69 = sphi 0, %s68
      %s83 = sphi 0, %s69
      %s87 = sphi 0, %s87
      %s89 = sphi 0, %s87
      %s90 = sphi 0, %s89
      %s104 = sphi 0, %s90
      %s108 = sphi 0, %s108
      %s110 = sphi 0, %s108
      %s111 = sphi 0, %s110
      %s125 = sphi 0, %s111
      %s129 = sphi 0, %s129
      %s131 = sphi 0, %s129
      %s132 = sphi 0, %s131
      %s146 = sphi 0, %s132
      %s154 = sphi 0, %s156
      %s157 = sphi 0, %s154
      %s158 = sphi 0, %s157
      %s174 = sphi 0, %s158
    $region4: #{tpu_custom_call.1} parent=1 // loop_header_branch
      %21 = sbr.rel (%p19) target = $region8
    $region5: #{tpu_custom_call.1} parent=1 // loop_body
      %s23 = ssub.s32 %s18, 1
      %s24 = ssub.s32 %s18, 2
      %s31 = sadd.s32 1, %s26
      %p32 = scmp.ge.s32.totalorder %s31, 2
      %s33 = scalar_select %p32, 0, %s31
      %s34 = sadd.s32 1, %s25
      %s35 = scalar_select %p32, %s34, %s25
      %p36 = scmp.ge.s32.totalorder %s35, 2
      %s37 = scalar_select %p36, 0, %s35
      %s38 = ssub.s32 %s25, %s37
      %s39 = ssub.s32 %s26, %s33
      %s40 = sor.u32 %s38, %s39
      %p41 = scmp.eq.s32.totalorder %s40, 0
      %s43 = sadd.s32 %s42, 1
      %s44 = scalar_select %p41, %s42, %s43
      %p47 = pneg %p41
      %p48 = scmp.eq.s32.totalorder %s18, 3
      %p49 = por %p47, %p48
      %p50 = scmp.ne.s32.totalorder %s42, %s45
      %p51 = scmp.eq.s32.totalorder %s18, 0
      %p52 = por %p50, %p51
      %p53 = scmp.ne.s32.totalorder %s42, %s45
      %p54 = scmp.eq.s32.totalorder %s23, 3
      %p55 = por %p53, %p54
      %p56 = scmp.ne.s32.totalorder %s45, %s46
      %p57 = scmp.eq.s32.totalorder %s23, 0
      %p58 = por %p56, %p57
      %p59 = scmp.ne.s32.totalorder %s45, %s46
      %p60 = scmp.eq.s32.totalorder %s24, 3
      %p61 = por %p59, %p60
      %p63 = scmp.ne.s32.totalorder %s46, %s62
      %p64 = scmp.eq.s32.totalorder %s24, 0
      %p65 = por %p63, %p64
      %s67 = sadd.s32 %s66, 1
      %p70 = scmp.eq.s32.totalorder %s18, 3
      %p71 = scmp.ne.s32.totalorder %s66, %s68
      %p72 = scmp.eq.s32.totalorder %s18, 0
      %p73 = por %p71, %p72
      %p74 = scmp.ne.s32.totalorder %s66, %s68
      %p75 = scmp.eq.s32.totalorder %s23, 3
      %p76 = por %p74, %p75
      %p77 = scmp.ne.s32.totalorder %s68, %s69
      %p78 = scmp.eq.s32.totalorder %s23, 0
      %p79 = por %p77, %p78
      %p80 = scmp.ne.s32.totalorder %s68, %s69
      %p81 = scmp.eq.s32.totalorder %s24, 3
      %p82 = por %p80, %p81
      %p84 = scmp.ne.s32.totalorder %s69, %s83
      %p85 = scmp.eq.s32.totalorder %s24, 0
      %p86 = por %p84, %p85
      %s88 = sadd.s32 %s87, 1
      %p91 = scmp.eq.s32.totalorder %s18, 3
      %p92 = scmp.ne.s32.totalorder %s87, %s89
      %p93 = scmp.eq.s32.totalorder %s18, 0
      %p94 = por %p92, %p93
      %p95 = scmp.ne.s32.totalorder %s87, %s89
      %p96 = scmp.eq.s32.totalorder %s23, 3
      %p97 = por %p95, %p96
      %p98 = scmp.ne.s32.totalorder %s89, %s90
      %p99 = scmp.eq.s32.totalorder %s23, 0
      %p100 = por %p98, %p99
      %p101 = scmp.ne.s32.totalorder %s89, %s90
      %p102 = scmp.eq.s32.totalorder %s24, 3
      %p103 = por %p101, %p102
      %p105 = scmp.ne.s32.totalorder %s90, %s104
      %p106 = scmp.eq.s32.totalorder %s24, 0
      %p107 = por %p105, %p106
      %s109 = sadd.s32 %s108, 1
      %p112 = scmp.eq.s32.totalorder %s18, 3
      %p113 = scmp.ne.s32.totalorder %s108, %s110
      %p114 = scmp.eq.s32.totalorder %s18, 0
      %p115 = por %p113, %p114
      %p116 = scmp.ne.s32.totalorder %s108, %s110
      %p117 = scmp.eq.s32.totalorder %s23, 3
      %p118 = por %p116, %p117
      %p119 = scmp.ne.s32.totalorder %s110, %s111
      %p120 = scmp.eq.s32.totalorder %s23, 0
      %p121 = por %p119, %p120
      %p122 = scmp.ne.s32.totalorder %s110, %s111
      %p123 = scmp.eq.s32.totalorder %s24, 3
      %p124 = por %p122, %p123
      %p126 = scmp.ne.s32.totalorder %s111, %s125
      %p127 = scmp.eq.s32.totalorder %s24, 0
      %p128 = por %p126, %p127
      %s130 = sadd.s32 %s129, 1
      %p133 = scmp.eq.s32.totalorder %s18, 3
      %p134 = scmp.ne.s32.totalorder %s129, %s131
      %p135 = scmp.eq.s32.totalorder %s18, 0
      %p136 = por %p134, %p135
      %p137 = scmp.ne.s32.totalorder %s129, %s131
      %p138 = scmp.eq.s32.totalorder %s23, 3
      %p139 = por %p137, %p138
      %p140 = scmp.ne.s32.totalorder %s131, %s132
      %p141 = scmp.eq.s32.totalorder %s23, 0
      %p142 = por %p140, %p141
      %p143 = scmp.ne.s32.totalorder %s131, %s132
      %p144 = scmp.eq.s32.totalorder %s24, 3
      %p145 = por %p143, %p144
      %p147 = scmp.ne.s32.totalorder %s132, %s146
      %p148 = scmp.eq.s32.totalorder %s24, 0
      %p149 = por %p147, %p148
      %s150 = ssub.s32 %s25, %s37
      %s151 = ssub.s32 %s26, %s33
      %s152 = sor.u32 %s150, %s151
      %p153 = scmp.eq.s32.totalorder %s152, 0
      %s155 = sadd.s32 %s154, 1
      %s156 = scalar_select %p153, %s154, %s155
      %p159 = pneg %p153
      %p160 = scmp.eq.s32.totalorder %s18, 3
      %p161 = por %p159, %p160
      %p162 = scmp.ne.s32.totalorder %s154, %s157
      %p163 = scmp.eq.s32.totalorder %s18, 0
      %p164 = por %p162, %p163
      %p165 = scmp.ne.s32.totalorder %s154, %s157
      %p166 = scmp.eq.s32.totalorder %s23, 3
      %p167 = por %p165, %p166
      %p168 = scmp.ne.s32.totalorder %s157, %s158
      %p169 = scmp.eq.s32.totalorder %s23, 0
      %p170 = por %p168, %p169
      %p171 = scmp.ne.s32.totalorder %s157, %s158
      %p172 = scmp.eq.s32.totalorder %s24, 3
      %p173 = por %p171, %p172
      %p175 = scmp.ne.s32.totalorder %s158, %s174
      %p176 = scmp.eq.s32.totalorder %s24, 0
      %p177 = por %p175, %p176
      %p178 = scmp.le.s32.totalorder 1, %s18
      %p179 = scmp.lt.s32.totalorder %s18, 5
      %p180 = pnand %p178, %p179
      %p181 = pneg %p180
      // Predicated region
      $region9: #{tpu_custom_call.1} parent=5 // pred_check
        _
      $region10: #{tpu_custom_call.1} parent=5 // pred_check_branch
        %183 = sbr.rel (%p180) target = $region12
      $region11: #{tpu_custom_call.1} parent=5 // pred_region
        %s184 = ssub.s32 %s18, 1
        // Predicated region
        $region13: #{tpu_custom_call.1} parent=11 // pred_check
          %p185 = pneg %p79
        $region14: #{tpu_custom_call.1} parent=11 // pred_check_branch
          %187 = sbr.rel (%p185) target = $region16
        $region15: #{tpu_custom_call.1} parent=11 // pred_region
          _
        $region16: #{tpu_custom_call.1} parent=11 // pred_fallthru
          _
        // Predicated region
        $region17: #{tpu_custom_call.1} parent=11 // pred_check
          %p188 = pneg %p100
        $region18: #{tpu_custom_call.1} parent=11 // pred_check_branch
          %190 = sbr.rel (%p188) target = $region20
        $region19: #{tpu_custom_call.1} parent=11 // pred_region
          _
        $region20: #{tpu_custom_call.1} parent=11 // pred_fallthru
          _
        // Predicated region
        $region21: #{tpu_custom_call.1} parent=11 // pred_check
          %p191 = pneg %p121
        $region22: #{tpu_custom_call.1} parent=11 // pred_check_branch
          %193 = sbr.rel (%p191) target = $region24
        $region23: #{tpu_custom_call.1} parent=11 // pred_region
          %s195 = ssub.s32 3072, 3072
          %196 = vsyncadd [#allocation6], %s195
          %s197 = sshll.u32 [#allocation5], 4
          %s198 = int_to_ptr.vmem [resolvable:$true] %s197
          %203 = dma.hbm_to_vmem [thread:$0]  %s3, 3072, %s198, [#allocation6], 192, 192, 12
        $region24: #{tpu_custom_call.1} parent=11 // pred_fallthru
          _
        // Predicated region
        $region25: #{tpu_custom_call.1} parent=11 // pred_check
          %p204 = pneg %p142
        $region26: #{tpu_custom_call.1} parent=11 // pred_check_branch
          %206 = sbr.rel (%p204) target = $region28
        $region27: #{tpu_custom_call.1} parent=11 // pred_region
          _
        $region28: #{tpu_custom_call.1} parent=11 // pred_fallthru
          _
      $region12: #{tpu_custom_call.1} parent=5 // pred_fallthru
        _
      %p207 = scmp.lt.s32.totalorder %s18, 4
      // Predicated region
      $region29: #{tpu_custom_call.1} parent=5 // pred_check
        %p208 = pneg %p207
      $region30: #{tpu_custom_call.1} parent=5 // pred_check_branch
        %210 = sbr.rel (%p208) target = $region32
      $region31: #{tpu_custom_call.1} parent=5 // pred_region
        // Predicated region
        $region33: #{tpu_custom_call.1} parent=31 // pred_check
          %p211 = pneg %p52
        $region34: #{tpu_custom_call.1} parent=31 // pred_check_branch
          %213 = sbr.rel (%p211) target = $region36
        $region35: #{tpu_custom_call.1} parent=31 // pred_region
          %s214 = sand.u32 %s42, 1
          %s215 = scalar_lea.sflag [#allocation3], %s214
          %s216 = sand.u32 %s42, 1
          %s217 = smul.addr %s216, 16
          %s218 = scalar_lea.vmem [#allocation2], %s217
          %s219 = smul.u32 2, %s26
          %s221 = ssub.s32 256, 256
          %222 = vsyncadd %s215, %s221
          %s223 = smul.addr %s25, 4
          %s224 = sadd.s32 %s219, %s223
          %s225 = smul.addr %s224, 128
          %s226 = scalar_lea.hbm %s0, %s225
          %s227 = sshll.u32 %s218, 4
          %s228 = int_to_ptr.vmem [resolvable:$true] %s227
          %233 = dma.hbm_to_vmem [thread:$0]  %s226, 256, %s228, %s215, 128, 128, 8
        $region36: #{tpu_custom_call.1} parent=31 // pred_fallthru
          _
      $region32: #{tpu_custom_call.1} parent=5 // pred_fallthru
        _
      %p234 = scmp.le.s32.totalorder 1, %s18
      %p235 = scmp.lt.s32.totalorder %s18, 5
      %p236 = pnand %p234, %p235
      %p237 = pneg %p236
      // Predicated region
      $region37: #{tpu_custom_call.1} parent=5 // pred_check
        _
      $region38: #{tpu_custom_call.1} parent=5 // pred_check_branch
        %239 = sbr.rel (%p236) target = $region40
      $region39: #{tpu_custom_call.1} parent=5 // pred_region
        %s240 = ssub.s32 %s18, 1
        %s241 = sand.u32 %s45, 1
        %s242 = scalar_lea.sflag [#allocation3], %s241
        %s243 = sand.u32 %s45, 1
        %s244 = smul.addr %s243, 16
        %s245 = scalar_lea.vmem [#allocation2], %s244
        // Predicated region
        $region41: #{tpu_custom_call.1} parent=39 // pred_check
          %p246 = pneg %p58
        $region42: #{tpu_custom_call.1} parent=39 // pred_check_branch
          %248 = sbr.rel (%p246) target = $region44
        $region43: #{tpu_custom_call.1} parent=39 // pred_region
          %249 = dma.done %s242, 256
        $region44: #{tpu_custom_call.1} parent=39 // pred_fallthru
          _
        // Predicated region
        $region45: #{tpu_custom_call.1} parent=39 // pred_check
          %p250 = pneg %p121
        $region46: #{tpu_custom_call.1} parent=39 // pred_check_branch
          %252 = sbr.rel (%p250) target = $region48
        $region47: #{tpu_custom_call.1} parent=39 // pred_region
          %253 = dma.done [#allocation6], 3072
        $region48: #{tpu_custom_call.1} parent=39 // pred_fallthru
          _
        %s254 = sand.u32 %s45, 1
        %s255 = scalar_lea.sflag [#allocation3], %s254
        %s256 = sand.u32 %s45, 1
        %s257 = smul.addr %s256, 16
        %s258 = scalar_lea.vmem [#allocation2], %s257
        %p259 = pneg %p58
        %p260 = pneg %p55
        %p261 = pneg %p79
        %p262 = pneg %p76
        %p263 = pneg %p100
        %p264 = pneg %p97
        %p265 = pneg %p121
        %p266 = pneg %p118
        %p267 = pneg %p142
        %p268 = pneg %p139
        %p269 = pneg %p170
        %p270 = pneg %p167
        %s271 = sand.u32 %s157, 1
        %s272 = scalar_lea.sflag [#allocation4], %s271
        %s273 = sand.u32 %s157, 1
        %s274 = smul.addr %s273, 24
        %s275 = scalar_lea.vmem [#allocation7], %s274
        %s276 = smul.u32 2, %s28
        %s277 = smul.u32 2, %s28
        %v279 = vld [vmem:[%s245] sm:$0xff]
        %v280 = vld [vmem:[%s245 + $0x8] sm:$0xff]
        %281 = vadd.xlane.f32.xlu0 %v279
        %v282 = vpop.xlane.xlu0 %281
        %283 = vadd.xlane.f32.xlu0 %v280
        %v284 = vpop.xlane.xlu0 %283
        %v285 = vrcp.pop 128.0
        %v286 = vmul.f32 %v282, %v285
        %v287 = vmul.f32 %v284, %v285
        %v288 = vsub.f32 %v279, %v286
        %v289 = vsub.f32 %v280, %v287
        %v290 = vmul.f32 %v288, %v288
        %v291 = vmul.f32 %v289, %v289
        %292 = vadd.xlane.f32.xlu0 %v290
        %v293 = vpop.xlane.xlu0 %292
        %294 = vadd.xlane.f32.xlu0 %v291
        %v295 = vpop.xlane.xlu0 %294
        %v296 = vmul.f32 %v293, %v285
        %v297 = vmul.f32 %v295, %v285
        %v298 = vadd.f32 %v296, 1e-05
        %v299 = vadd.f32 %v297, 1e-05
        %v300 = vrsqrt.pop %v298
        %v301 = vrsqrt.pop %v299
        %v302 = vmul.f32 %v288, %v300
        %v303 = vmul.f32 %v289, %v301
        %v304 = vld [vmem:[%s1] sm:$0x1]
        %v306 = vlaneseq
        %v307 = vshrl.u32 %v306, 7
        %v308 = vsub.s32 0, %v307
        %v309 = vrot.slane %v304, %v308
        %v311 = vmul.f32 %v302, %v309
        %v312 = vmul.f32 %v303, %v309
        %v313 = vld [vmem:[%s2] sm:$0x1]
        %v315 = vlaneseq
        %v316 = vshrl.u32 %v315, 7
        %v317 = vsub.s32 0, %v316
        %v318 = vrot.slane %v313, %v317
        %v320 = vadd.f32 %v311, %v318
        %v321 = vadd.f32 %v312, %v318
        %v322 = vpack.c.bf16 %v321, %v320
        %v323 = vld [vmem:[#allocation5] sm:$0xff]
        %v324 = vld [vmem:[#allocation5 + $0x8] sm:$0xf]
        %v325 = vld [vmem:[#allocation5 + $0xc] sm:$0xff]
        %v326 = vld [vmem:[#allocation5 + $0x14] sm:$0xf]
        %v327 = vld [vmem:[#allocation5 + $0x18] sm:$0xff]
        %v328 = vld [vmem:[#allocation5 + $0x20] sm:$0xf]
        %v329 = vld [vmem:[#allocation5 + $0x24] sm:$0xff]
        %v330 = vld [vmem:[#allocation5 + $0x2c] sm:$0xf]
        %v331 = vld [vmem:[#allocation5 + $0x30] sm:$0xff]
        %v332 = vld [vmem:[#allocation5 + $0x38] sm:$0xf]
        %v333 = vld [vmem:[#allocation5 + $0x3c] sm:$0xff]
        %v334 = vld [vmem:[#allocation5 + $0x44] sm:$0xf]
        %v335 = vld [vmem:[#allocation5 + $0x48] sm:$0xff]
        %v336 = vld [vmem:[#allocation5 + $0x50] sm:$0xf]
        %v337 = vld [vmem:[#allocation5 + $0x54] sm:$0xff]
        %v338 = vld [vmem:[#allocation5 + $0x5c] sm:$0xf]
        %v339 = vld [vmem:[#allocation5 + $0x60] sm:$0xff]
        %v340 = vld [vmem:[#allocation5 + $0x68] sm:$0xf]
        %v341 = vld [vmem:[#allocation5 + $0x6c] sm:$0xff]
        %v342 = vld [vmem:[#allocation5 + $0x74] sm:$0xf]
        %v343 = vld [vmem:[#allocation5 + $0x78] sm:$0xff]
        %v344 = vld [vmem:[#allocation5 + $0x80] sm:$0xf]
        %v345 = vld [vmem:[#allocation5 + $0x84] sm:$0xff]
        %v346 = vld [vmem:[#allocation5 + $0x8c] sm:$0xf]
        %v347 = vld [vmem:[#allocation5 + $0x90] sm:$0xff]
        %v348 = vld [vmem:[#allocation5 + $0x98] sm:$0xf]
        %v349 = vld [vmem:[#allocation5 + $0x9c] sm:$0xff]
        %v350 = vld [vmem:[#allocation5 + $0xa4] sm:$0xf]
        %v351 = vld [vmem:[#allocation5 + $0xa8] sm:$0xff]
        %v352 = vld [vmem:[#allocation5 + $0xb0] sm:$0xf]
        %v353 = vld [vmem:[#allocation5 + $0xb4] sm:$0xff]
        %v354 = vld [vmem:[#allocation5 + $0xbc] sm:$0xf]
        %v355 = vld [vmem:[%s4] sm:$0x7]
        %v357 = vlaneseq
        %v358 = vshrl.u32 %v357, 7
        %v359 = vsub.s32 0, %v358
        %v360 = vrot.slane %v355, %v359
        %v361 = vlaneseq
        %v362 = vshrl.u32 %v361, 7
        %v363 = vsub.s32 1, %v362
        %v364 = vrot.slane %v355, %v363
        %v365 = vlaneseq
        %v366 = vshrl.u32 %v365, 7
        %v367 = vsub.s32 2, %v366
        %v368 = vrot.slane %v355, %v367
        %v404 = vunpack.c.l.b16 %v323
        %v405 = vunpack.c.h.b16 %v323
        %v406 = vunpack.c.l.b16 %v324
        %v407 = vunpack.c.l.b16 %v325
        %v408 = vunpack.c.h.b16 %v325
        %v409 = vunpack.c.l.b16 %v326
        %v410 = vunpack.c.l.b16 %v327
        %v411 = vunpack.c.h.b16 %v327
        %v412 = vunpack.c.l.b16 %v328
        %v413 = vunpack.c.l.b16 %v329
        %v414 = vunpack.c.h.b16 %v329
        %v415 = vunpack.c.l.b16 %v330
        %v416 = vunpack.c.l.b16 %v331
        %v417 = vunpack.c.h.b16 %v331
        %v418 = vunpack.c.l.b16 %v332
        %v419 = vunpack.c.l.b16 %v333
        %v420 = vunpack.c.h.b16 %v333
        %v421 = vunpack.c.l.b16 %v334
        %v422 = vunpack.c.l.b16 %v335
        %v423 = vunpack.c.h.b16 %v335
        %v424 = vunpack.c.l.b16 %v336
        %v425 = vunpack.c.l.b16 %v337
        %v426 = vunpack.c.h.b16 %v337
        %v427 = vunpack.c.l.b16 %v338
        %v428 = vunpack.c.l.b16 %v339
        %v429 = vunpack.c.h.b16 %v339
        %v430 = vunpack.c.l.b16 %v340
        %v431 = vunpack.c.l.b16 %v341
        %v432 = vunpack.c.h.b16 %v341
        %v433 = vunpack.c.l.b16 %v342
        %v434 = vunpack.c.l.b16 %v343
        %v435 = vunpack.c.h.b16 %v343
        %v436 = vunpack.c.l.b16 %v344
        %v437 = vunpack.c.l.b16 %v345
        %v438 = vunpack.c.h.b16 %v345
        %v439 = vunpack.c.l.b16 %v346
        %v440 = vunpack.c.l.b16 %v347
        %v441 = vunpack.c.h.b16 %v347
        %v442 = vunpack.c.l.b16 %v348
        %v443 = vunpack.c.l.b16 %v349
        %v444 = vunpack.c.h.b16 %v349
        %v445 = vunpack.c.l.b16 %v350
        %v446 = vunpack.c.l.b16 %v351
        %v447 = vunpack.c.h.b16 %v351
        %v448 = vunpack.c.l.b16 %v352
        %v449 = vunpack.c.l.b16 %v353
        %v450 = vunpack.c.h.b16 %v353
        %v451 = vunpack.c.l.b16 %v354
        %v452 = vpack.c.b16 %v407, %v404
        %v453 = vpack.c.b16 %v408, %v405
        %v454 = vpack.c.b16 %v409, %v406
        %v455 = vpack.c.b16 %v413, %v410
        %v456 = vpack.c.b16 %v414, %v411
        %v457 = vpack.c.b16 %v415, %v412
        %v458 = vpack.c.b16 %v419, %v416
        %v459 = vpack.c.b16 %v420, %v417
        %v460 = vpack.c.b16 %v421, %v418
        %v461 = vpack.c.b16 %v425, %v422
        %v462 = vpack.c.b16 %v426, %v423
        %v463 = vpack.c.b16 %v427, %v424
        %v464 = vpack.c.b16 %v431, %v428
        %v465 = vpack.c.b16 %v432, %v429
        %v466 = vpack.c.b16 %v433, %v430
        %v467 = vpack.c.b16 %v437, %v434
        %v468 = vpack.c.b16 %v438, %v435
        %v469 = vpack.c.b16 %v439, %v436
        %v470 = vpack.c.b16 %v443, %v440
        %v471 = vpack.c.b16 %v444, %v441
        %v472 = vpack.c.b16 %v445, %v442
        %v473 = vpack.c.b16 %v449, %v446
        %v474 = vpack.c.b16 %v450, %v447
        %v475 = vpack.c.b16 %v451, %v448
        %500 = vmatprep.subr.bf16.mxu0 %v453
        %501 = vmatpush1.bf16.msra.mxu0 %v452
        %502 = vmatprep.subr.bf16.mxu0 %v456
        %503 = vmatpush1.bf16.msra.mxu0 %v455
        %504 = vmatprep.subr.bf16.mxu0 %v459
        %505 = vmatpush1.bf16.msra.mxu0 %v458
        %506 = vmatprep.subr.bf16.mxu0 %v462
        %507 = vmatpush1.bf16.msra.mxu0 %v461
        %508 = vmatprep.subr.bf16.mxu0 %v465
        %509 = vmatpush1.bf16.msra.mxu0 %v464
        %510 = vmatprep.subr.bf16.mxu0 %v468
        %511 = vmatpush1.bf16.msra.mxu0 %v467
        %512 = vmatprep.subr.bf16.mxu0 %v471
        %513 = vmatpush1.bf16.msra.mxu0 %v470
        %514 = vmatprep.subr.bf16.mxu0 %v474
        %515 = vmatpush1.bf16.msra.mxu0 %v473
        %516 = vmatprep.subr.bf16.mxu0 0
        %517 = vmatpush1.bf16.msra.mxu0 0
        %518 = vmatprep.subr.bf16.mxu0 0
        %519 = vmatpush1.bf16.msra.mxu0 0
        %520 = vmatprep.subr.bf16.mxu0 0
        %521 = vmatpush1.bf16.msra.mxu0 0
        %522 = vmatprep.subr.bf16.mxu0 0
        %523 = vmatpush1.bf16.msra.mxu0 0
        %524 = vmatprep.subr.bf16.mxu0 0
        %525 = vmatpush1.bf16.msra.mxu0 0
        %526 = vmatprep.subr.bf16.mxu0 0
        %527 = vmatpush1.bf16.msra.mxu0 0
        %528 = vmatprep.subr.bf16.mxu0 0
        %529 = vmatpush1.bf16.msra.mxu0 0
        %530 = vmatprep.subr.bf16.mxu0 0
        %531 = vmatpush1.bf16.msra.mxu0 0
        %532 = vmatprep.mubr.bf16.mxu0 0
        %533 = vmatmul.mubr.bf16.gmra.mrb[0].mxu0 %v322
        %v534 = vpop.f32.mrb[0].mxu0
        %v535 = vadd.f32 %v360, %v534
        %v536 = vpop.f32.mrb[0].mxu0
        %v537 = vadd.f32 %v364, %v536
        %v538 = vpop.f32.mrb[0].mxu0
        %v539 = vadd.f32 %v360, %v538
        %v540 = vpop.f32.mrb[0].mxu0
        %v541 = vadd.f32 %v364, %v540
        %542 = vdwg.mxu0
        %543 = vmatprep.subr.bf16.mxu0 0
        %544 = vmatpush1.bf16.msra.mxu0 %v454
        %545 = vmatprep.subr.bf16.mxu0 0
        %546 = vmatpush1.bf16.msra.mxu0 %v457
        %547 = vmatprep.subr.bf16.mxu0 0
        %548 = vmatpush1.bf16.msra.mxu0 %v460
        %549 = vmatprep.subr.bf16.mxu0 0
        %550 = vmatpush1.bf16.msra.mxu0 %v463
        %551 = vmatprep.subr.bf16.mxu0 0
        %552 = vmatpush1.bf16.msra.mxu0 %v466
        %553 = vmatprep.subr.bf16.mxu0 0
        %554 = vmatpush1.bf16.msra.mxu0 %v469
        %555 = vmatprep.subr.bf16.mxu0 0
        %556 = vmatpush1.bf16.msra.mxu0 %v472
        %557 = vmatprep.subr.bf16.mxu0 0
        %558 = vmatpush1.bf16.msra.mxu0 %v475
        %559 = vmatprep.subr.bf16.mxu0 0
        %560 = vmatpush1.bf16.msra.mxu0 0
        %561 = vmatprep.subr.bf16.mxu0 0
        %562 = vmatpush1.bf16.msra.mxu0 0
        %563 = vmatprep.subr.bf16.mxu0 0
        %564 = vmatpush1.bf16.msra.mxu0 0
        %565 = vmatprep.subr.bf16.mxu0 0
        %566 = vmatpush1.bf16.msra.mxu0 0
        %567 = vmatprep.subr.bf16.mxu0 0
        %568 = vmatpush1.bf16.msra.mxu0 0
        %569 = vmatprep.subr.bf16.mxu0 0
        %570 = vmatpush1.bf16.msra.mxu0 0
        %571 = vmatprep.subr.bf16.mxu0 0
        %572 = vmatpush1.bf16.msra.mxu0 0
        %573 = vmatprep.subr.bf16.mxu0 0
        %574 = vmatpush1.bf16.msra.mxu0 0
        %575 = vmatprep.mubr.bf16.mxu0 0
        %576 = vmatmul.mubr.bf16.gmra.mrb[0].mxu0 %v322
        %v577 = vpop.f32.mrb[0].mxu0
        %v578 = vadd.f32 %v368, %v577
        %v579 = vpop.f32.mrb[0].mxu0
        %v580 = vpop.f32.mrb[0].mxu0
        %v581 = vadd.f32 %v368, %v580
        %v582 = vpop.f32.mrb[0].mxu0
        %583 = vdwg.mxu0
        %v584 = vpack.c.bf16 %v539, %v535
        %v585 = vpack.c.bf16 %v541, %v537
        %v586 = vpack.c.bf16 %v581, %v578
        %v590 = vunpack.c.l.b16 %v584
        %v591 = vunpack.c.l.b16 %v585
        %v592 = vunpack.c.l.b16 %v586
        %v593 = vunpack.c.h.b16 %v584
        %v594 = vunpack.c.h.b16 %v585
        %v595 = vunpack.c.h.b16 %v586
        %v596 = vpack.c.b16 %v591, %v590
        %v597 = vpack.c.b16 %v592, %v592
        %v598 = vpack.c.b16 %v594, %v593
        %v599 = vpack.c.b16 %v595, %v595
        %604 = vst [vmem:[%s275] sm:$0xff] %v596
        %605 = vst [vmem:[%s275 + $0x8] sm:$0xf] %v597
        %606 = vst [vmem:[%s275 + $0xc] sm:$0xff] %v598
        %607 = vst [vmem:[%s275 + $0x14] sm:$0xf] %v599
        %s608 = sand.u32 %s157, 1
        %s609 = scalar_lea.sflag [#allocation4], %s608
        %s610 = sand.u32 %s157, 1
        %s611 = smul.addr %s610, 24
        %s612 = scalar_lea.vmem [#allocation7], %s611
        // Predicated region
        $region49: #{tpu_custom_call.1} parent=39 // pred_check
          %p613 = pneg %p167
        $region50: #{tpu_custom_call.1} parent=39 // pred_check_branch
          %615 = sbr.rel (%p613) target = $region52
        $region51: #{tpu_custom_call.1} parent=39 // pred_region
          %s616 = smul.u32 2, %s28
          %s618 = ssub.s32 384, 384
          %619 = vsyncadd %s609, %s618
          %s620 = smul.addr %s616, 3
          %s621 = smul.addr %s27, 12
          %s622 = sadd.s32 %s620, %s621
          %s623 = smul.addr %s622, 64
          %s624 = scalar_lea.hbm %s5, %s623
          %s625 = sshll.u32 %s612, 4
          %s626 = int_to_ptr.vmem [resolvable:$true] %s625
          %631 = dma.vmem_to_hbm [thread:$0]  %s626, 384, %s624, %s609, 192, 192, 12
        $region52: #{tpu_custom_call.1} parent=39 // pred_fallthru
          _
      $region40: #{tpu_custom_call.1} parent=5 // pred_fallthru
        _
      %p632 = scmp.le.s32.totalorder 2, %s18
      // Predicated region
      $region53: #{tpu_custom_call.1} parent=5 // pred_check
        %p633 = pneg %p632
      $region54: #{tpu_custom_call.1} parent=5 // pred_check_branch
        %635 = sbr.rel (%p633) target = $region56
      $region55: #{tpu_custom_call.1} parent=5 // pred_region
        %s636 = ssub.s32 %s18, 2
        // Predicated region
        $region57: #{tpu_custom_call.1} parent=55 // pred_check
          %p637 = pneg %p173
        $region58: #{tpu_custom_call.1} parent=55 // pred_check_branch
          %639 = sbr.rel (%p637) target = $region60
        $region59: #{tpu_custom_call.1} parent=55 // pred_region
          %s640 = sand.u32 %s158, 1
          %s641 = scalar_lea.sflag [#allocation4], %s640
          %s642 = sand.u32 %s158, 1
          %s643 = smul.addr %s642, 24
          %s644 = scalar_lea.vmem [#allocation7], %s643
          %645 = dma.done %s641, 384
        $region60: #{tpu_custom_call.1} parent=55 // pred_fallthru
          _
      $region56: #{tpu_custom_call.1} parent=5 // pred_fallthru
        _
    $region6: #{tpu_custom_call.1} parent=1 // loop_footer
      %s22 = sadd.s32 1, %s18
    $region7: #{tpu_custom_call.1} parent=1 // loop_footer_branch
      %17 = sbr.rel target = $region3
    $region8: #{tpu_custom_call.1} parent=1 // loop_exit
      _
    %646 = vsyncpa [#allocation3], 1
    %s647 = scalar_lea.sflag [#allocation3], 1
    %648 = vsyncpa %s647, 1
    %649 = vsyncpa [#allocation6], 1
    %650 = vsyncpa [#allocation4], 1
    %s651 = scalar_lea.sflag [#allocation4], 1
    %652 = vsyncpa %s651, 1

</llo_original>
